<compile_context>
chip_gen: v6e
topology: v6e:2x2x1
jax: 0.10.0
libtpu: 0.0.40
codegen_flags: <defaults>
</compile_context>

<pallas_src>
import jax
import jax.numpy as jnp
from jax.experimental import pallas as pl
from jax.experimental.pallas import tpu as pltpu

_PROJ = 128       # projection width fixed by the module (Linear(H, 128))
_SLAB = 2 * _PROJ


def _proj_kernel(hid_ref, w_se_ref, b_se_ref, u_slab_ref, u_bias_ref,
                 z_ref, end_t_ref, c_ref):
    # hid: (1, T, H)   w_se: (H, 256)   b_se: (1, 256)
    # u_slab: (128, 256) = [U_xy | u_col | 0]   u_bias: (1, 256) = [u_row | u_cc | 0]
    h = hid_ref[0]                                                      # (T, H)
    proj = jnp.dot(h, w_se_ref[...], preferred_element_type=jnp.float32)
    proj = proj + b_se_ref[...].astype(jnp.float32)                     # (T, 256) = [start|end]
    start = proj[:, :_PROJ]
    # One MXU op yields both the left biaffine factor Z and the per-row scalar c.
    slab = jnp.dot(start, u_slab_ref[...], preferred_element_type=jnp.float32)
    slab = slab + u_bias_ref[...]                                       # (T, 256) = [Z | c | 0]
    z_ref[0] = slab[:, :_PROJ].astype(z_ref.dtype)
    c_ref[0] = slab[:, _PROJ:_PROJ + 1]                                 # (T, 1) f32
    # Pre-transpose END; store lane-dense along the sequence axis for Kernel B.
    end_t_ref[0] = jnp.transpose(proj[:, _PROJ:]).astype(end_t_ref.dtype)


def _span_kernel(z_ref, c_ref, end_t_ref, span_ref):
    # z: (1, TI, 128)  c: (1, TI, 1)  end_t: (1, 128, seq_pad) resident  span: (1, TI, TJ)
    tj = span_ref.shape[2]
    off = pl.multiple_of(pl.program_id(2) * tj, tj)
    end_t = end_t_ref[0, :, pl.ds(off, tj)]                             # (128, TJ)
    span = jnp.dot(z_ref[0], end_t, preferred_element_type=jnp.float32)
    span_ref[0] = (span + c_ref[0]).astype(span_ref.dtype)


def _largest_tile(seq_pad, cap):
    """Largest multiple of 128 that divides seq_pad and is <= cap."""
    m = seq_pad // 128
    for g in range(min(cap // 128, m), 0, -1):
        if m % g == 0:
            return 128 * g
    return 128


def biaffine_tagger(hidden, w_start, b_start, w_end, b_end, U,
                    *, proj_tile_cap=256, span_tile_cap=512):
    """hidden: (bs, seq, H) -> span_logits (bs, seq, seq) in hidden.dtype."""
    bs, seq, hdim = hidden.shape
    assert U.shape == (_PROJ + 1, 1, _PROJ + 1)
    cdtype = hidden.dtype                      # storage dtype for start/end/Z/span
    csize = jnp.dtype(cdtype).itemsize
    mib = 1 << 20

    # Fused [start | end] projection -> single lane-dense 256-wide matmul.
    # Keep weights in the model dtype (no f32 up-cast in the wrapper).
    w_se = jnp.concatenate([w_start, w_end], axis=1).astype(cdtype)          # (H, 256)
    b_se = jnp.concatenate([b_start.reshape(1, _PROJ),
                            b_end.reshape(1, _PROJ)], axis=1).astype(cdtype)  # (1, 256)

    # (128, 256) biaffine slab: one MXU matmul yields [Z | c].
    u0 = U[:, 0, :].astype(jnp.float32)                                      # (129, 129)
    u_slab = jnp.zeros((_PROJ, _SLAB), jnp.float32)
    u_slab = u_slab.at[:, :_PROJ].set(u0[:_PROJ, :_PROJ])
    u_slab = u_slab.at[:, _PROJ].set(u0[:_PROJ, _PROJ])
    u_bias = jnp.zeros((1, _SLAB), jnp.float32)
    u_bias = u_bias.at[0, :_PROJ].set(u0[_PROJ, :_PROJ])
    u_bias = u_bias.at[0, _PROJ].set(u0[_PROJ, _PROJ])

    # Pad seq only to the 128-lane granule (span traffic scales with seq_pad**2).
    seq_pad = -(-seq // 128) * 128
    if seq_pad != seq:
        hidden = jnp.pad(hidden, ((0, 0), (0, seq_pad - seq), (0, 0)))

    tile_a = _largest_tile(seq_pad, proj_tile_cap)       # projection row tile
    tile_b = _largest_tile(seq_pad, span_tile_cap)       # span tile (decoupled, bigger)
    n_a = seq_pad // tile_a
    n_b = seq_pad // tile_b

    # ---------------- Kernel A: projections + [Z | c] + END^T -----------------
    vmem_a = 2 * (tile_a * hdim * csize + hdim * _SLAB * csize + _SLAB * csize
                  + _PROJ * _SLAB * 4 + _SLAB * 4
                  + 2 * tile_a * _PROJ * csize + tile_a * _PROJ * 4)
    z, end_t, c = pl.pallas_call(
        _proj_kernel,
        out_shape=(jax.ShapeDtypeStruct((bs, seq_pad, _PROJ), cdtype),   # Z
                   jax.ShapeDtypeStruct((bs, _PROJ, seq_pad), cdtype),   # END^T
                   jax.ShapeDtypeStruct((bs, seq_pad, 1), jnp.float32)),  # c
        grid_spec=pltpu.PrefetchScalarGridSpec(
            num_scalar_prefetch=0,
            grid=(bs, n_a),
            in_specs=[
                pl.BlockSpec((1, tile_a, hdim), lambda b, t: (b, t, 0)),   # hidden tile
                pl.BlockSpec((hdim, _SLAB), lambda b, t: (0, 0)),          # fused W (resident)
                pl.BlockSpec((1, _SLAB), lambda b, t: (0, 0)),             # fused bias
                pl.BlockSpec((_PROJ, _SLAB), lambda b, t: (0, 0)),         # U slab
                pl.BlockSpec((1, _SLAB), lambda b, t: (0, 0)),             # U bias row
            ],
            out_specs=(pl.BlockSpec((1, tile_a, _PROJ), lambda b, t: (b, t, 0)),
                       pl.BlockSpec((1, _PROJ, tile_a), lambda b, t: (b, 0, t)),
                       pl.BlockSpec((1, tile_a, 1), lambda b, t: (b, t, 0))),
        ),
        compiler_params=pltpu.CompilerParams(
            dimension_semantics=("parallel", "parallel"),
            vmem_limit_bytes=int(min(64 * mib, max(32 * mib, vmem_a + 16 * mib)))),
        cost_estimate=pl.CostEstimate(
            flops=2 * bs * seq_pad * hdim * _SLAB + 2 * bs * seq_pad * _PROJ * _SLAB,
            transcendentals=0,
            bytes_accessed=bs * seq_pad * hdim * csize
            + (w_se.size + b_se.size) * csize + (u_slab.size + u_bias.size) * 4
            + bs * seq_pad * (2 * _PROJ * csize + 4)),
    )(hidden, w_se, b_se, u_slab, u_bias)

    # ---------------- Kernel B: span tile = Z_i @ END^T[:, j] + c_i -----------
    vmem_b = 2 * (tile_b * _PROJ * csize + tile_b * _PROJ * 4
                  + _PROJ * seq_pad * csize + tile_b * tile_b * csize)
    span = pl.pallas_call(
        _span_kernel,
        out_shape=jax.ShapeDtypeStruct((bs, seq_pad, seq_pad), cdtype),
        grid_spec=pltpu.PrefetchScalarGridSpec(
            num_scalar_prefetch=0,
            grid=(bs, n_b, n_b),
            in_specs=[
                pl.BlockSpec((1, tile_b, _PROJ), lambda b, i, j: (b, i, 0)),   # Z_i
                pl.BlockSpec((1, tile_b, 1), lambda b, i, j: (b, i, 0)),       # c_i
                pl.BlockSpec((1, _PROJ, seq_pad), lambda b, i, j: (b, 0, 0)),  # END^T (resident)
            ],
            out_specs=pl.BlockSpec((1, tile_b, tile_b), lambda b, i, j: (b, i, j)),
        ),
        compiler_params=pltpu.CompilerParams(
            dimension_semantics=("parallel", "parallel", "parallel"),
            vmem_limit_bytes=int(min(64 * mib, max(32 * mib, vmem_b + 16 * mib)))),
        cost_estimate=pl.CostEstimate(
            flops=2 * bs * seq_pad * seq_pad * _PROJ,
            transcendentals=0,
            bytes_accessed=bs * seq_pad * (2 * _PROJ * csize + 4)
            + bs * seq_pad * seq_pad * csize),
    )(z, c, end_t)

    return span[:, :seq, :seq]


def init_params(key, hidden_size):
    """Mirrors nn.Linear default init + torch.randn for U."""
    k1, k2, k3, k4, k5 = jax.random.split(key, 5)
    s = 1.0 / jnp.sqrt(hidden_size)
    w_start = jax.random.uniform(k1, (hidden_size, _PROJ), jnp.float32, -s, s)
    b_start = jax.random.uniform(k2, (_PROJ,), jnp.float32, -s, s)
    w_end = jax.random.uniform(k3, (hidden_size, _PROJ), jnp.float32, -s, s)
    b_end = jax.random.uniform(k4, (_PROJ,), jnp.float32, -s, s)
    U = jax.random.normal(k5, (_PROJ + 1, 1, _PROJ + 1), jnp.float32)
    return w_start, b_start, w_end, b_end, U


if __name__ == "__main__":
    batch, seq_len, hidden_size = 2, 8, 32
    key = jax.random.PRNGKey(0)
    kx, kp = jax.random.split(key)
    x = jax.random.normal(kx, (batch, seq_len, hidden_size), jnp.float32)
    params = init_params(kp, hidden_size)

    span_out = biaffine_tagger(x, *params)
    jax.block_until_ready(span_out)

    # Reference: identical math to the PyTorch module, full f32 precision.
    w_s, b_s, w_e, b_e, U = params
    with jax.default_matmul_precision("highest"):
        start = x @ w_s + b_s.reshape(1, 1, -1)
        end = x @ w_e + b_e.reshape(1, 1, -1)
        x_aug = jnp.concatenate([start, jnp.ones_like(start[..., :1])], axis=-1)
        y_aug = jnp.concatenate([end, jnp.ones_like(end[..., :1])], axis=-1)
        span_ref = jnp.einsum("bxi,ioj,byj->bxyo", x_aug, U, y_aug)[..., 0]

    assert span_out.shape == (batch, seq_len, seq_len), span_out.shape
    assert jnp.allclose(span_out, span_ref, rtol=5e-3, atol=5e-2), (
        "max abs err = %g" % float(jnp.max(jnp.abs(span_out - span_ref))))
    print("KERNEL_OK")
</pallas_src>

<mosaic_0001>
module attributes {stable_mosaic.version = 11 : i64} {
  func.func @_proj_kernel(%arg0: i32, %arg1: i32, %arg2: memref<1x128x32xf32, #tpu.memory_space<vmem>>, %arg3: memref<32x256xf32, #tpu.memory_space<vmem>>, %arg4: memref<1x256xf32, #tpu.memory_space<vmem>>, %arg5: memref<128x256xf32, #tpu.memory_space<vmem>>, %arg6: memref<1x256xf32, #tpu.memory_space<vmem>>, %arg7: memref<1x128x128xf32, #tpu.memory_space<vmem>>, %arg8: memref<1x128x128xf32, #tpu.memory_space<vmem>>, %arg9: memref<1x128x1xf32, #tpu.memory_space<vmem>>) attributes {dimension_semantics = [#tpu.dimension_semantics<parallel>, #tpu.dimension_semantics<parallel>], iteration_bounds = array<i64: 2, 1>, scalar_prefetch = 0 : i64, scratch_operands = 0 : i64, tpu.core_type = #tpu.core_type<tc>, window_params = [{transform_indices = @transform_0, window_bounds = array<i64: 1, 128, 32>}, {pipeline_mode = #tpu.pipeline_mode<synchronous>, transform_indices = @transform_1, window_bounds = array<i64: 32, 256>}, {pipeline_mode = #tpu.pipeline_mode<synchronous>, transform_indices = @transform_2, window_bounds = array<i64: 1, 256>}, {pipeline_mode = #tpu.pipeline_mode<synchronous>, transform_indices = @transform_3, window_bounds = array<i64: 128, 256>}, {pipeline_mode = #tpu.pipeline_mode<synchronous>, transform_indices = @transform_4, window_bounds = array<i64: 1, 256>}, {transform_indices = @transform_5, window_bounds = array<i64: 1, 128, 128>}, {transform_indices = @transform_6, window_bounds = array<i64: 1, 128, 128>}, {transform_indices = @transform_7, window_bounds = array<i64: 1, 128, 1>}]} {
    %c0 = arith.constant 0 : index
    %c0_0 = arith.constant 0 : index
    %c0_1 = arith.constant 0 : index
    %0 = vector.load %arg2[%c0, %c0_0, %c0_1] : memref<1x128x32xf32, #tpu.memory_space<vmem>>, vector<1x128x32xf32>
    %1 = vector.shape_cast %0 : vector<1x128x32xf32> to vector<128x32xf32>
    %c0_2 = arith.constant 0 : index
    %c0_3 = arith.constant 0 : index
    %2 = vector.load %arg3[%c0_2, %c0_3] : memref<32x256xf32, #tpu.memory_space<vmem>>, vector<32x256xf32>
    %cst = arith.constant dense<0.000000e+00> : vector<128x256xf32>
    %3 = tpu.matmul %1, %2, %cst {dimension_numbers = #tpu.dot_dimension_numbers<[1], [0], [0], [1], [0, 0, 1, 1], [], []>} : vector<128x32xf32>, vector<32x256xf32>, vector<128x256xf32> -> vector<128x256xf32>
    %c0_4 = arith.constant 0 : index
    %c0_5 = arith.constant 0 : index
    %4 = vector.load %arg4[%c0_4, %c0_5] : memref<1x256xf32, #tpu.memory_space<vmem>>, vector<1x256xf32>
    %5 = vector.broadcast %4 : vector<1x256xf32> to vector<128x256xf32>
    %6 = arith.addf %3, %5 : vector<128x256xf32>
    %7 = vector.extract_strided_slice %6 {offsets = [0, 0], sizes = [128, 128], strides = [1, 1]} : vector<128x256xf32> to vector<128x128xf32>
    %c0_6 = arith.constant 0 : index
    %c0_7 = arith.constant 0 : index
    %8 = vector.load %arg5[%c0_6, %c0_7] : memref<128x256xf32, #tpu.memory_space<vmem>>, vector<128x256xf32>
    %cst_8 = arith.constant dense<0.000000e+00> : vector<128x256xf32>
    %9 = tpu.matmul %7, %8, %cst_8 {dimension_numbers = #tpu.dot_dimension_numbers<[1], [0], [0], [1], [0, 0, 1, 1], [], []>} : vector<128x128xf32>, vector<128x256xf32>, vector<128x256xf32> -> vector<128x256xf32>
    %c0_9 = arith.constant 0 : index
    %c0_10 = arith.constant 0 : index
    %10 = vector.load %arg6[%c0_9, %c0_10] : memref<1x256xf32, #tpu.memory_space<vmem>>, vector<1x256xf32>
    %11 = vector.broadcast %10 : vector<1x256xf32> to vector<128x256xf32>
    %12 = arith.addf %9, %11 : vector<128x256xf32>
    %13 = vector.extract_strided_slice %12 {offsets = [0, 0], sizes = [128, 128], strides = [1, 1]} : vector<128x256xf32> to vector<128x128xf32>
    %c0_11 = arith.constant 0 : index
    %c0_12 = arith.constant 0 : index
    %c0_13 = arith.constant 0 : index
    %14 = vector.load %arg7[%c0_11, %c0_12, %c0_13] : memref<1x128x128xf32, #tpu.memory_space<vmem>>, vector<1x128x128xf32>
    %15 = vector.shape_cast %14 : vector<1x128x128xf32> to vector<128x128xf32>
    %16 = vector.shape_cast %13 : vector<128x128xf32> to vector<1x128x128xf32>
    tpu.vector_store %arg7[%c0_11, %c0_12, %c0_13], %16 {strides = array<i32>} : memref<1x128x128xf32, #tpu.memory_space<vmem>>, vector<1x128x128xf32>,
    %17 = vector.extract_strided_slice %12 {offsets = [0, 128], sizes = [128, 1], strides = [1, 1]} : vector<128x256xf32> to vector<128x1xf32>
    %c0_14 = arith.constant 0 : index
    %c0_15 = arith.constant 0 : index
    %c0_16 = arith.constant 0 : index
    %18 = vector.load %arg9[%c0_14, %c0_15, %c0_16] : memref<1x128x1xf32, #tpu.memory_space<vmem>>, vector<1x128x1xf32>
    %19 = vector.shape_cast %18 : vector<1x128x1xf32> to vector<128x1xf32>
    %20 = vector.shape_cast %17 : vector<128x1xf32> to vector<1x128x1xf32>
    tpu.vector_store %arg9[%c0_14, %c0_15, %c0_16], %20 {strides = array<i32>} : memref<1x128x1xf32, #tpu.memory_space<vmem>>, vector<1x128x1xf32>,
    %21 = vector.extract_strided_slice %6 {offsets = [0, 128], sizes = [128, 128], strides = [1, 1]} : vector<128x256xf32> to vector<128x128xf32>
    %22 = tpu.transpose %21, [1, 0] : vector<128x128xf32> -> vector<128x128xf32>
    %c0_17 = arith.constant 0 : index
    %c0_18 = arith.constant 0 : index
    %c0_19 = arith.constant 0 : index
    %23 = vector.load %arg8[%c0_17, %c0_18, %c0_19] : memref<1x128x128xf32, #tpu.memory_space<vmem>>, vector<1x128x128xf32>
    %24 = vector.shape_cast %23 : vector<1x128x128xf32> to vector<128x128xf32>
    %25 = vector.shape_cast %22 : vector<128x128xf32> to vector<1x128x128xf32>
    tpu.vector_store %arg8[%c0_17, %c0_18, %c0_19], %25 {strides = array<i32>} : memref<1x128x128xf32, #tpu.memory_space<vmem>>, vector<1x128x128xf32>,
    return
  }
  func.func @transform_0(%arg0: i32, %arg1: i32) -> (i32, i32, i32) {
    %c0_i32 = arith.constant 0 : i32
    %c0_i32_0 = arith.constant 0 : i32
    return %arg0, %arg1, %c0_i32 : i32, i32, i32
  }
  func.func @transform_1(%arg0: i32, %arg1: i32) -> (i32, i32) {
    %c0_i32 = arith.constant 0 : i32
    %c0_i32_0 = arith.constant 0 : i32
    %c0_i32_1 = arith.constant 0 : i32
    return %c0_i32, %c0_i32_0 : i32, i32
  }
  func.func @transform_2(%arg0: i32, %arg1: i32) -> (i32, i32) {
    %c0_i32 = arith.constant 0 : i32
    %c0_i32_0 = arith.constant 0 : i32
    %c0_i32_1 = arith.constant 0 : i32
    return %c0_i32, %c0_i32_0 : i32, i32
  }
  func.func @transform_3(%arg0: i32, %arg1: i32) -> (i32, i32) {
    %c0_i32 = arith.constant 0 : i32
    %c0_i32_0 = arith.constant 0 : i32
    %c0_i32_1 = arith.constant 0 : i32
    return %c0_i32, %c0_i32_0 : i32, i32
  }
  func.func @transform_4(%arg0: i32, %arg1: i32) -> (i32, i32) {
    %c0_i32 = arith.constant 0 : i32
    %c0_i32_0 = arith.constant 0 : i32
    %c0_i32_1 = arith.constant 0 : i32
    return %c0_i32, %c0_i32_0 : i32, i32
  }
  func.func @transform_5(%arg0: i32, %arg1: i32) -> (i32, i32, i32) {
    %c0_i32 = arith.constant 0 : i32
    %c0_i32_0 = arith.constant 0 : i32
    return %arg0, %arg1, %c0_i32 : i32, i32, i32
  }
  func.func @transform_6(%arg0: i32, %arg1: i32) -> (i32, i32, i32) {
    %c0_i32 = arith.constant 0 : i32
    %c0_i32_0 = arith.constant 0 : i32
    return %arg0, %c0_i32, %arg1 : i32, i32, i32
  }
  func.func @transform_7(%arg0: i32, %arg1: i32) -> (i32, i32, i32) {
    %c0_i32 = arith.constant 0 : i32
    %c0_i32_0 = arith.constant 0 : i32
    return %arg0, %arg1, %c0_i32 : i32, i32, i32
  }
}

</mosaic_0001>

<llo_original>
// kernel: tpu_custom_call.1
$region0: #{tpu_custom_call.1}
  #allocation0 [shape = 'u32[]', space=smem, size = 0x4, offset = 0x4, fixed_abs, tag = 'smem constant byte address 0x4 - core index']
  #allocation1 [shape = 'u32[144,128]{1,0:T(1,128)}', space=vmem, size = 0x12000, scoped, tag = 'internal scratch']
  %s0 = inlined_call_operand.vmem [shape: f32[2,128,32], index: 0, kind: input, shape index: {}]
  %s1 = inlined_call_operand.vmem [shape: f32[32,256], index: 1, kind: input, shape index: {}]
  %s2 = inlined_call_operand.vmem [shape: f32[1,256], index: 2, kind: input, shape index: {}]
  %s3 = inlined_call_operand.vmem [shape: f32[128,256], index: 3, kind: input, shape index: {}]
  %s4 = inlined_call_operand.vmem [shape: f32[1,256], index: 4, kind: input, shape index: {}]
  %s5 = inlined_call_operand.hbm [shape: f32[2,128,128], index: 5, kind: output, shape index: {0}]
  %s6 = inlined_call_operand.hbm [shape: f32[2,128,128], index: 6, kind: output, shape index: {1}]
  %s7 = inlined_call_operand.vmem [shape: f32[2,128,1], index: 7, kind: output, shape index: {2}]
  %8 = xla_tuple %s5, %s6, %s7
  %s9 = sld [smem:[#allocation0]]
  $region69: #{tpu_custom_call.1} parent=0
    _
  %s11 = ssub.s32 1, %s9
  %s12 = scalar_select 0, %s11, %s9
  $region1: #{tpu_custom_call.1} parent=0
    #allocation2 [shape = 'u8[131072]{0}', space=vmem, size = 0x20000, scoped, tag = 'output window, operand 0']
    #allocation3 [shape = 's32[2]{0}', space=sflag, size = 0x8, scoped, tag = 'scoped memory for tpu_custom_call.1']
    #allocation4 [shape = 'u8[131072]{0}', space=vmem, size = 0x20000, scoped, tag = 'output window, operand 1']
    #allocation5 [shape = 's32[2]{0}', space=sflag, size = 0x8, scoped, tag = 'scoped memory for tpu_custom_call.1']
    %13 = vsyncpa [#allocation3], 0
    %s14 = scalar_lea.sflag [#allocation3], 1
    %15 = vsyncpa %s14, 0
    %16 = vsyncpa [#allocation5], 0
    %s17 = scalar_lea.sflag [#allocation5], 1
    %18 = vsyncpa %s17, 0
    loop: start=0, step=1, limit=4
    $region2: #{tpu_custom_call.1} parent=1 // loop_pre_header
      _
    $region3: #{tpu_custom_call.1} parent=1 // loop_header
      %s20 = sphi 0, %s24
      %p21 = scmp.ge.s32.totalorder %s20, 4
      %s27 = sphi 0, %s39
      %s28 = sphi 0, %s35
      %s29 = sphi 0, %s27
      %s30 = sphi 0, %s28
      %s31 = sphi 0, %s29
      %s32 = sphi 0, %s30
      %s44 = sphi 0, %s46
      %s47 = sphi 0, %s44
      %s48 = sphi 0, %s47
      %s64 = sphi 0, %s48
      %s68 = sphi 0, %s68
      %s70 = sphi 0, %s68
      %s71 = sphi 0, %s70
      %s85 = sphi 0, %s71
      %s89 = sphi 0, %s89
      %s91 = sphi 0, %s89
      %s92 = sphi 0, %s91
      %s106 = sphi 0, %s92
      %s110 = sphi 0, %s110
      %s112 = sphi 0, %s110
      %s113 = sphi 0, %s112
      %s127 = sphi 0, %s113
      %s131 = sphi 0, %s131
      %s133 = sphi 0, %s131
      %s134 = sphi 0, %s133
      %s148 = sphi 0, %s134
      %s156 = sphi 0, %s158
      %s159 = sphi 0, %s156
      %s160 = sphi 0, %s159
      %s176 = sphi 0, %s160
      %s184 = sphi 0, %s186
      %s187 = sphi 0, %s184
      %s188 = sphi 0, %s187
      %s204 = sphi 0, %s188
      %s212 = sphi 0, %s214
      %s215 = sphi 0, %s212
      %s216 = sphi 0, %s215
      %s232 = sphi 0, %s216
    $region4: #{tpu_custom_call.1} parent=1 // loop_header_branch
      %23 = sbr.rel (%p21) target = $region8
    $region5: #{tpu_custom_call.1} parent=1 // loop_body
      %s25 = ssub.s32 %s20, 1
      %s26 = ssub.s32 %s20, 2
      %s33 = sadd.s32 1, %s28
      %p34 = scmp.ge.s32.totalorder %s33, 1
      %s35 = scalar_select %p34, 0, %s33
      %s36 = sadd.s32 1, %s27
      %s37 = scalar_select %p34, %s36, %s27
      %p38 = scmp.ge.s32.totalorder %s37, 2
      %s39 = scalar_select %p38, 0, %s37
      %s40 = ssub.s32 %s27, %s39
      %s41 = ssub.s32 %s28, %s35
      %s42 = sor.u32 %s40, %s41
      %p43 = scmp.eq.s32.totalorder %s42, 0
      %s45 = sadd.s32 %s44, 1
      %s46 = scalar_select %p43, %s44, %s45
      %p49 = pneg %p43
      %p50 = scmp.eq.s32.totalorder %s20, 1
      %p51 = por %p49, %p50
      %p52 = scmp.ne.s32.totalorder %s44, %s47
      %p53 = scmp.eq.s32.totalorder %s20, 0
      %p54 = por %p52, %p53
      %p55 = scmp.ne.s32.totalorder %s44, %s47
      %p56 = scmp.eq.s32.totalorder %s25, 1
      %p57 = por %p55, %p56
      %p58 = scmp.ne.s32.totalorder %s47, %s48
      %p59 = scmp.eq.s32.totalorder %s25, 0
      %p60 = por %p58, %p59
      %p61 = scmp.ne.s32.totalorder %s47, %s48
      %p62 = scmp.eq.s32.totalorder %s26, 1
      %p63 = por %p61, %p62
      %p65 = scmp.ne.s32.totalorder %s48, %s64
      %p66 = scmp.eq.s32.totalorder %s26, 0
      %p67 = por %p65, %p66
      %s69 = sadd.s32 %s68, 1
      %p72 = scmp.eq.s32.totalorder %s20, 1
      %p73 = scmp.ne.s32.totalorder %s68, %s70
      %p74 = scmp.eq.s32.totalorder %s20, 0
      %p75 = por %p73, %p74
      %p76 = scmp.ne.s32.totalorder %s68, %s70
      %p77 = scmp.eq.s32.totalorder %s25, 1
      %p78 = por %p76, %p77
      %p79 = scmp.ne.s32.totalorder %s70, %s71
      %p80 = scmp.eq.s32.totalorder %s25, 0
      %p81 = por %p79, %p80
      %p82 = scmp.ne.s32.totalorder %s70, %s71
      %p83 = scmp.eq.s32.totalorder %s26, 1
      %p84 = por %p82, %p83
      %p86 = scmp.ne.s32.totalorder %s71, %s85
      %p87 = scmp.eq.s32.totalorder %s26, 0
      %p88 = por %p86, %p87
      %s90 = sadd.s32 %s89, 1
      %p93 = scmp.eq.s32.totalorder %s20, 1
      %p94 = scmp.ne.s32.totalorder %s89, %s91
      %p95 = scmp.eq.s32.totalorder %s20, 0
      %p96 = por %p94, %p95
      %p97 = scmp.ne.s32.totalorder %s89, %s91
      %p98 = scmp.eq.s32.totalorder %s25, 1
      %p99 = por %p97, %p98
      %p100 = scmp.ne.s32.totalorder %s91, %s92
      %p101 = scmp.eq.s32.totalorder %s25, 0
      %p102 = por %p100, %p101
      %p103 = scmp.ne.s32.totalorder %s91, %s92
      %p104 = scmp.eq.s32.totalorder %s26, 1
      %p105 = por %p103, %p104
      %p107 = scmp.ne.s32.totalorder %s92, %s106
      %p108 = scmp.eq.s32.totalorder %s26, 0
      %p109 = por %p107, %p108
      %s111 = sadd.s32 %s110, 1
      %p114 = scmp.eq.s32.totalorder %s20, 1
      %p115 = scmp.ne.s32.totalorder %s110, %s112
      %p116 = scmp.eq.s32.totalorder %s20, 0
      %p117 = por %p115, %p116
      %p118 = scmp.ne.s32.totalorder %s110, %s112
      %p119 = scmp.eq.s32.totalorder %s25, 1
      %p120 = por %p118, %p119
      %p121 = scmp.ne.s32.totalorder %s112, %s113
      %p122 = scmp.eq.s32.totalorder %s25, 0
      %p123 = por %p121, %p122
      %p124 = scmp.ne.s32.totalorder %s112, %s113
      %p125 = scmp.eq.s32.totalorder %s26, 1
      %p126 = por %p124, %p125
      %p128 = scmp.ne.s32.totalorder %s113, %s127
      %p129 = scmp.eq.s32.totalorder %s26, 0
      %p130 = por %p128, %p129
      %s132 = sadd.s32 %s131, 1
      %p135 = scmp.eq.s32.totalorder %s20, 1
      %p136 = scmp.ne.s32.totalorder %s131, %s133
      %p137 = scmp.eq.s32.totalorder %s20, 0
      %p138 = por %p136, %p137
      %p139 = scmp.ne.s32.totalorder %s131, %s133
      %p140 = scmp.eq.s32.totalorder %s25, 1
      %p141 = por %p139, %p140
      %p142 = scmp.ne.s32.totalorder %s133, %s134
      %p143 = scmp.eq.s32.totalorder %s25, 0
      %p144 = por %p142, %p143
      %p145 = scmp.ne.s32.totalorder %s133, %s134
      %p146 = scmp.eq.s32.totalorder %s26, 1
      %p147 = por %p145, %p146
      %p149 = scmp.ne.s32.totalorder %s134, %s148
      %p150 = scmp.eq.s32.totalorder %s26, 0
      %p151 = por %p149, %p150
      %s152 = ssub.s32 %s27, %s39
      %s153 = ssub.s32 %s28, %s35
      %s154 = sor.u32 %s152, %s153
      %p155 = scmp.eq.s32.totalorder %s154, 0
      %s157 = sadd.s32 %s156, 1
      %s158 = scalar_select %p155, %s156, %s157
      %p161 = pneg %p155
      %p162 = scmp.eq.s32.totalorder %s20, 1
      %p163 = por %p161, %p162
      %p164 = scmp.ne.s32.totalorder %s156, %s159
      %p165 = scmp.eq.s32.totalorder %s20, 0
      %p166 = por %p164, %p165
      %p167 = scmp.ne.s32.totalorder %s156, %s159
      %p168 = scmp.eq.s32.totalorder %s25, 1
      %p169 = por %p167, %p168
      %p170 = scmp.ne.s32.totalorder %s159, %s160
      %p171 = scmp.eq.s32.totalorder %s25, 0
      %p172 = por %p170, %p171
      %p173 = scmp.ne.s32.totalorder %s159, %s160
      %p174 = scmp.eq.s32.totalorder %s26, 1
      %p175 = por %p173, %p174
      %p177 = scmp.ne.s32.totalorder %s160, %s176
      %p178 = scmp.eq.s32.totalorder %s26, 0
      %p179 = por %p177, %p178
      %s180 = ssub.s32 %s27, %s39
      %s181 = ssub.s32 %s28, %s35
      %s182 = sor.u32 %s180, %s181
      %p183 = scmp.eq.s32.totalorder %s182, 0
      %s185 = sadd.s32 %s184, 1
      %s186 = scalar_select %p183, %s184, %s185
      %p189 = pneg %p183
      %p190 = scmp.eq.s32.totalorder %s20, 1
      %p191 = por %p189, %p190
      %p192 = scmp.ne.s32.totalorder %s184, %s187
      %p193 = scmp.eq.s32.totalorder %s20, 0
      %p194 = por %p192, %p193
      %p195 = scmp.ne.s32.totalorder %s184, %s187
      %p196 = scmp.eq.s32.totalorder %s25, 1
      %p197 = por %p195, %p196
      %p198 = scmp.ne.s32.totalorder %s187, %s188
      %p199 = scmp.eq.s32.totalorder %s25, 0
      %p200 = por %p198, %p199
      %p201 = scmp.ne.s32.totalorder %s187, %s188
      %p202 = scmp.eq.s32.totalorder %s26, 1
      %p203 = por %p201, %p202
      %p205 = scmp.ne.s32.totalorder %s188, %s204
      %p206 = scmp.eq.s32.totalorder %s26, 0
      %p207 = por %p205, %p206
      %s208 = ssub.s32 %s27, %s39
      %s209 = ssub.s32 %s28, %s35
      %s210 = sor.u32 %s208, %s209
      %p211 = scmp.eq.s32.totalorder %s210, 0
      %s213 = sadd.s32 %s212, 1
      %s214 = scalar_select %p211, %s212, %s213
      %p217 = pneg %p211
      %p218 = scmp.eq.s32.totalorder %s20, 1
      %p219 = por %p217, %p218
      %p220 = scmp.ne.s32.totalorder %s212, %s215
      %p221 = scmp.eq.s32.totalorder %s20, 0
      %p222 = por %p220, %p221
      %p223 = scmp.ne.s32.totalorder %s212, %s215
      %p224 = scmp.eq.s32.totalorder %s25, 1
      %p225 = por %p223, %p224
      %p226 = scmp.ne.s32.totalorder %s215, %s216
      %p227 = scmp.eq.s32.totalorder %s25, 0
      %p228 = por %p226, %p227
      %p229 = scmp.ne.s32.totalorder %s215, %s216
      %p230 = scmp.eq.s32.totalorder %s26, 1
      %p231 = por %p229, %p230
      %p233 = scmp.ne.s32.totalorder %s216, %s232
      %p234 = scmp.eq.s32.totalorder %s26, 0
      %p235 = por %p233, %p234
      %p236 = scmp.le.s32.totalorder 1, %s20
      %p237 = scmp.lt.s32.totalorder %s20, 3
      %p238 = pnand %p236, %p237
      %p239 = pneg %p238
      // Predicated region
      $region9: #{tpu_custom_call.1} parent=5 // pred_check
        _
      $region10: #{tpu_custom_call.1} parent=5 // pred_check_branch
        %241 = sbr.rel (%p238) target = $region12
      $region11: #{tpu_custom_call.1} parent=5 // pred_region
        %s242 = ssub.s32 %s20, 1
        // Predicated region
        $region13: #{tpu_custom_call.1} parent=11 // pred_check
          %p243 = pneg %p81
        $region14: #{tpu_custom_call.1} parent=11 // pred_check_branch
          %245 = sbr.rel (%p243) target = $region16
        $region15: #{tpu_custom_call.1} parent=11 // pred_region
          _
        $region16: #{tpu_custom_call.1} parent=11 // pred_fallthru
          _
        // Predicated region
        $region17: #{tpu_custom_call.1} parent=11 // pred_check
          %p246 = pneg %p102
        $region18: #{tpu_custom_call.1} parent=11 // pred_check_branch
          %248 = sbr.rel (%p246) target = $region20
        $region19: #{tpu_custom_call.1} parent=11 // pred_region
          _
        $region20: #{tpu_custom_call.1} parent=11 // pred_fallthru
          _
        // Predicated region
        $region21: #{tpu_custom_call.1} parent=11 // pred_check
          %p249 = pneg %p123
        $region22: #{tpu_custom_call.1} parent=11 // pred_check_branch
          %251 = sbr.rel (%p249) target = $region24
        $region23: #{tpu_custom_call.1} parent=11 // pred_region
          _
        $region24: #{tpu_custom_call.1} parent=11 // pred_fallthru
          _
        // Predicated region
        $region25: #{tpu_custom_call.1} parent=11 // pred_check
          %p252 = pneg %p144
        $region26: #{tpu_custom_call.1} parent=11 // pred_check_branch
          %254 = sbr.rel (%p252) target = $region28
        $region27: #{tpu_custom_call.1} parent=11 // pred_region
          _
        $region28: #{tpu_custom_call.1} parent=11 // pred_fallthru
          _
      $region12: #{tpu_custom_call.1} parent=5 // pred_fallthru
        _
      %p255 = scmp.lt.s32.totalorder %s20, 2
      // Predicated region
      $region29: #{tpu_custom_call.1} parent=5 // pred_check
        %p256 = pneg %p255
      $region30: #{tpu_custom_call.1} parent=5 // pred_check_branch
        %258 = sbr.rel (%p256) target = $region32
      $region31: #{tpu_custom_call.1} parent=5 // pred_region
        // Predicated region
        $region33: #{tpu_custom_call.1} parent=31 // pred_check
          %p259 = pneg %p54
        $region34: #{tpu_custom_call.1} parent=31 // pred_check_branch
          %261 = sbr.rel (%p259) target = $region36
        $region35: #{tpu_custom_call.1} parent=31 // pred_region
          %s262 = smul.u32 16, %s28
          %p263 = scmp.lt.s32.totalorder %s27, 1
          %s264 = scalar_select %p263, %s27, 1
          %p265 = scmp.lt.s32.totalorder %s262, 15
          %s266 = scalar_select %p265, %s262, 15
          %s267 = smul.addr %s264, 16
          %s268 = sadd.s32 %s266, %s267
          %s269 = smul.addr %s268, 8
          %s270 = scalar_lea.vmem %s0, %s269
          %s271 = smul.u32 16, %s28
        $region36: #{tpu_custom_call.1} parent=31 // pred_fallthru
          _
      $region32: #{tpu_custom_call.1} parent=5 // pred_fallthru
        _
      %p272 = scmp.le.s32.totalorder 1, %s20
      %p273 = scmp.lt.s32.totalorder %s20, 3
      %p274 = pnand %p272, %p273
      %p275 = pneg %p274
      // Predicated region
      $region37: #{tpu_custom_call.1} parent=5 // pred_check
        _
      $region38: #{tpu_custom_call.1} parent=5 // pred_check_branch
        %277 = sbr.rel (%p274) target = $region40
      $region39: #{tpu_custom_call.1} parent=5 // pred_region
        %s278 = ssub.s32 %s20, 1
        %s279 = smul.u32 16, %s30
        %p280 = scmp.lt.s32.totalorder %s29, 1
        %s281 = scalar_select %p280, %s29, 1
        %p282 = scmp.lt.s32.totalorder %s279, 15
        %s283 = scalar_select %p282, %s279, 15
        %s284 = smul.addr %s281, 16
        %s285 = sadd.s32 %s283, %s284
        %s286 = smul.addr %s285, 8
        %s287 = scalar_lea.vmem %s0, %s286
        %p288 = pneg %p60
        %p289 = pneg %p57
        %p290 = pneg %p81
        %p291 = pneg %p78
        %p292 = pneg %p102
        %p293 = pneg %p99
        %p294 = pneg %p123
        %p295 = pneg %p120
        %p296 = pneg %p144
        %p297 = pneg %p141
        %p298 = pneg %p172
        %p299 = pneg %p169
        %s300 = sand.u32 %s159, 1
        %s301 = scalar_lea.sflag [#allocation3], %s300
        %s302 = sand.u32 %s159, 1
        %s303 = smul.addr %s302, 128
        %s304 = scalar_lea.vmem [#allocation2], %s303
        %p305 = pneg %p200
        %p306 = pneg %p197
        %s307 = sand.u32 %s187, 1
        %s308 = scalar_lea.sflag [#allocation5], %s307
        %s309 = sand.u32 %s187, 1
        %s310 = smul.addr %s309, 128
        %s311 = scalar_lea.vmem [#allocation4], %s310
        %p312 = pneg %p228
        %p313 = pneg %p225
        %s314 = smul.u32 16, %s30
        %p315 = scmp.lt.s32.totalorder %s29, 1
        %s316 = scalar_select %p315, %s29, 1
        %p317 = scmp.lt.s32.totalorder %s314, 15
        %s318 = scalar_select %p317, %s314, 15
        %s319 = smul.addr %s316, 16
        %s320 = sadd.s32 %s318, %s319
        %s321 = smul.addr %s320, 8
        %s322 = scalar_lea.vmem %s7, %s321
        %s323 = smul.u32 16, %s30
        %p324 = scmp.lt.s32.totalorder %s29, 1
        %s325 = scalar_select %p324, %s29, 1
        %p326 = scmp.lt.s32.totalorder %s323, 15
        %s327 = scalar_select %p326, %s323, 15
        %s328 = smul.addr %s325, 16
        %s329 = sadd.s32 %s327, %s328
        %s330 = smul.addr %s329, 8
        %s331 = scalar_lea.vmem %s0, %s330
        %s332 = smul.u32 16, %s30
        %s333 = smul.u32 16, %s30
        %s334 = smul.u32 16, %s30
        %p335 = scmp.lt.s32.totalorder %s29, 1
        %s336 = scalar_select %p335, %s29, 1
        %p337 = scmp.lt.s32.totalorder %s334, 15
        %s338 = scalar_select %p337, %s334, 15
        %s339 = smul.addr %s336, 16
        %s340 = sadd.s32 %s338, %s339
        %s341 = smul.addr %s340, 8
        %s342 = scalar_lea.vmem %s7, %s341
        %s343 = smul.u32 16, %s30
        %v344 = vld [vmem:[%s331] sm:$0xff]
        %v345 = vld [vmem:[%s331 + $0x8] sm:$0xff]
        %v346 = vld [vmem:[%s331 + $0x10] sm:$0xff]
        %v347 = vld [vmem:[%s331 + $0x18] sm:$0xff]
        %v348 = vld [vmem:[%s331 + $0x20] sm:$0xff]
        %v349 = vld [vmem:[%s331 + $0x28] sm:$0xff]
        %v350 = vld [vmem:[%s331 + $0x30] sm:$0xff]
        %v351 = vld [vmem:[%s331 + $0x38] sm:$0xff]
        %v352 = vld [vmem:[%s331 + $0x40] sm:$0xff]
        %v353 = vld [vmem:[%s331 + $0x48] sm:$0xff]
        %v354 = vld [vmem:[%s331 + $0x50] sm:$0xff]
        %v355 = vld [vmem:[%s331 + $0x58] sm:$0xff]
        %v356 = vld [vmem:[%s331 + $0x60] sm:$0xff]
        %v357 = vld [vmem:[%s331 + $0x68] sm:$0xff]
        %v358 = vld [vmem:[%s331 + $0x70] sm:$0xff]
        %v359 = vld [vmem:[%s331 + $0x78] sm:$0xff]
        %v360 = vld [vmem:[%s1] sm:$0xff]
        %v361 = vld [vmem:[%s1 + $0x8] sm:$0xff]
        %v362 = vld [vmem:[%s1 + $0x10] sm:$0xff]
        %v363 = vld [vmem:[%s1 + $0x18] sm:$0xff]
        %v364 = vld [vmem:[%s1 + $0x20] sm:$0xff]
        %v365 = vld [vmem:[%s1 + $0x28] sm:$0xff]
        %v366 = vld [vmem:[%s1 + $0x30] sm:$0xff]
        %v367 = vld [vmem:[%s1 + $0x38] sm:$0xff]
        %v368 = vld [vmem:[%s2] sm:$0x3]
        %v370 = vlaneseq
        %v371 = vshrl.u32 %v370, 7
        %v372 = vsub.s32 0, %v371
        %v373 = vrot.slane %v368, %v372
        %v374 = vlaneseq
        %v375 = vshrl.u32 %v374, 7
        %v376 = vsub.s32 1, %v375
        %v377 = vrot.slane %v368, %v376
        %vm380 = vcmask 261120
        %v382 = vsel %vm380, %v344, 0
        %v385 = vsel %vm380, %v345, 0
        %v388 = vsel %vm380, %v346, 0
        %v391 = vsel %vm380, %v347, 0
        %v394 = vsel %vm380, %v348, 0
        %v397 = vsel %vm380, %v349, 0
        %v400 = vsel %vm380, %v350, 0
        %v403 = vsel %vm380, %v351, 0
        %v406 = vsel %vm380, %v352, 0
        %v409 = vsel %vm380, %v353, 0
        %v412 = vsel %vm380, %v354, 0
        %v415 = vsel %vm380, %v355, 0
        %v418 = vsel %vm380, %v356, 0
        %v421 = vsel %vm380, %v357, 0
        %v424 = vsel %vm380, %v358, 0
        %v427 = vsel %vm380, %v359, 0
        %429 = vmatprep.subr.mxu0 0.0
        %430 = vmatpush1.msra.mxu0 0.0
        %431 = vmatprep.subr.mxu0 0.0
        %432 = vmatpush1.msra.mxu0 0.0
        %433 = vmatprep.subr.mxu0 0.0
        %434 = vmatpush1.msra.mxu0 0.0
        %435 = vmatprep.subr.mxu0 0.0
        %436 = vmatpush1.msra.mxu0 0.0
        %437 = vmatprep.subr.mxu0 0.0
        %438 = vmatpush1.msra.mxu0 0.0
        %439 = vmatprep.subr.mxu0 0.0
        %440 = vmatpush1.msra.mxu0 0.0
        %441 = vmatprep.subr.mxu0 0.0
        %442 = vmatpush1.msra.mxu0 0.0
        %443 = vmatprep.subr.mxu0 0.0
        %444 = vmatpush1.msra.mxu0 0.0
        %445 = vmatprep.subr.mxu0 0.0
        %446 = vmatpush1.msra.mxu0 0.0
        %447 = vmatprep.subr.mxu0 0.0
        %448 = vmatpush1.msra.mxu0 0.0
        %449 = vmatprep.subr.mxu0 0.0
        %450 = vmatpush1.msra.mxu0 0.0
        %451 = vmatprep.subr.mxu0 0.0
        %452 = vmatpush1.msra.mxu0 0.0
        %453 = vmatprep.subr.mxu0 %v367
        %454 = vmatpush1.msra.mxu0 %v366
        %455 = vmatprep.subr.mxu0 %v365
        %456 = vmatpush1.msra.mxu0 %v364
        %457 = vmatprep.subr.mxu0 %v363
        %458 = vmatpush1.msra.mxu0 %v362
        %459 = vmatprep.subr.mxu0 %v361
        %460 = vmatpush1.msra.mxu0 %v360
        %461 = vmatprep.subr.mxu0 0.0
        %462 = vmatpush2.msra.mxu0 0.0
        %463 = vmatprep.subr.mxu0 0.0
        %464 = vmatpush2.msra.mxu0 0.0
        %465 = vmatprep.subr.mxu0 0.0
        %466 = vmatpush2.msra.mxu0 0.0
        %467 = vmatprep.subr.mxu0 0.0
        %468 = vmatpush2.msra.mxu0 0.0
        %469 = vmatprep.subr.mxu0 0.0
        %470 = vmatpush2.msra.mxu0 0.0
        %471 = vmatprep.subr.mxu0 0.0
        %472 = vmatpush2.msra.mxu0 0.0
        %473 = vmatprep.subr.mxu0 0.0
        %474 = vmatpush2.msra.mxu0 0.0
        %475 = vmatprep.subr.mxu0 0.0
        %476 = vmatpush2.msra.mxu0 0.0
        %477 = vmatprep.subr.mxu0 0.0
        %478 = vmatpush2.msra.mxu0 0.0
        %479 = vmatprep.subr.mxu0 0.0
        %480 = vmatpush2.msra.mxu0 0.0
        %481 = vmatprep.subr.mxu0 0.0
        %482 = vmatpush2.msra.mxu0 0.0
        %483 = vmatprep.subr.mxu0 0.0
        %484 = vmatpush2.msra.mxu0 0.0
        %485 = vmatprep.subr.mxu0 0.0
        %486 = vmatpush2.msra.mxu0 0.0
        %487 = vmatprep.subr.mxu0 0.0
        %488 = vmatpush2.msra.mxu0 0.0
        %489 = vmatprep.subr.mxu0 0.0
        %490 = vmatpush2.msra.mxu0 0.0
        %491 = vmatprep.subr.mxu0 0.0
        %492 = vmatpush2.msra.mxu0 0.0
        %493 = vmatprep.mubr.f32.mxu0 0.0
        %494 = vmatmul.mubr.f32.gmra.mxu0 %v382
        %v495 = vpop.f32.mrf.mxu0
        %v496 = vadd.f32 %v373, %v495
        %v497 = vpop.f32.mrf.mxu0
        %v498 = vadd.f32 %v377, %v497
        %499 = vmatprep.mubr.f32.mxu0 0.0
        %500 = vmatmul.mubr.f32.gmra.mxu0 %v385
        %v501 = vpop.f32.mrf.mxu0
        %v502 = vadd.f32 %v373, %v501
        %v503 = vpop.f32.mrf.mxu0
        %v504 = vadd.f32 %v377, %v503
        %505 = vmatprep.mubr.f32.mxu0 0.0
        %506 = vmatmul.mubr.f32.gmra.mxu0 %v388
        %v507 = vpop.f32.mrf.mxu0
        %v508 = vadd.f32 %v373, %v507
        %v509 = vpop.f32.mrf.mxu0
        %v510 = vadd.f32 %v377, %v509
        %511 = vmatprep.mubr.f32.mxu0 0.0
        %512 = vmatmul.mubr.f32.gmra.mxu0 %v391
        %v513 = vpop.f32.mrf.mxu0
        %v514 = vadd.f32 %v373, %v513
        %v515 = vpop.f32.mrf.mxu0
        %v516 = vadd.f32 %v377, %v515
        %517 = vmatprep.mubr.f32.mxu0 0.0
        %518 = vmatmul.mubr.f32.gmra.mxu0 %v394
        %v519 = vpop.f32.mrf.mxu0
        %v520 = vadd.f32 %v373, %v519
        %v521 = vpop.f32.mrf.mxu0
        %v522 = vadd.f32 %v377, %v521
        %523 = vmatprep.mubr.f32.mxu0 0.0
        %524 = vmatmul.mubr.f32.gmra.mxu0 %v397
        %v525 = vpop.f32.mrf.mxu0
        %v526 = vadd.f32 %v373, %v525
        %v527 = vpop.f32.mrf.mxu0
        %v528 = vadd.f32 %v377, %v527
        %529 = vmatprep.mubr.f32.mxu0 0.0
        %530 = vmatmul.mubr.f32.gmra.mxu0 %v400
        %v531 = vpop.f32.mrf.mxu0
        %v532 = vadd.f32 %v373, %v531
        %v533 = vpop.f32.mrf.mxu0
        %v534 = vadd.f32 %v377, %v533
        %535 = vmatprep.mubr.f32.mxu0 0.0
        %536 = vmatmul.mubr.f32.gmra.mxu0 %v403
        %v537 = vpop.f32.mrf.mxu0
        %v538 = vadd.f32 %v373, %v537
        %v539 = vpop.f32.mrf.mxu0
        %v540 = vadd.f32 %v377, %v539
        %541 = vmatprep.mubr.f32.mxu0 0.0
        %542 = vmatmul.mubr.f32.gmra.mxu0 %v406
        %v543 = vpop.f32.mrf.mxu0
        %v544 = vadd.f32 %v373, %v543
        %v545 = vpop.f32.mrf.mxu0
        %v546 = vadd.f32 %v377, %v545
        %547 = vmatprep.mubr.f32.mxu0 0.0
        %548 = vmatmul.mubr.f32.gmra.mxu0 %v409
        %v549 = vpop.f32.mrf.mxu0
        %v550 = vadd.f32 %v373, %v549
        %v551 = vpop.f32.mrf.mxu0
        %v552 = vadd.f32 %v377, %v551
        %553 = vmatprep.mubr.f32.mxu0 0.0
        %554 = vmatmul.mubr.f32.gmra.mxu0 %v412
        %v555 = vpop.f32.mrf.mxu0
        %v556 = vadd.f32 %v373, %v555
        %v557 = vpop.f32.mrf.mxu0
        %v558 = vadd.f32 %v377, %v557
        %559 = vmatprep.mubr.f32.mxu0 0.0
        %560 = vmatmul.mubr.f32.gmra.mxu0 %v415
        %v561 = vpop.f32.mrf.mxu0
        %v562 = vadd.f32 %v373, %v561
        %v563 = vpop.f32.mrf.mxu0
        %v564 = vadd.f32 %v377, %v563
        %565 = vmatprep.mubr.f32.mxu0 0.0
        %566 = vmatmul.mubr.f32.gmra.mxu0 %v418
        %v567 = vpop.f32.mrf.mxu0
        %v568 = vadd.f32 %v373, %v567
        %v569 = vpop.f32.mrf.mxu0
        %v570 = vadd.f32 %v377, %v569
        %571 = vmatprep.mubr.f32.mxu0 0.0
        %572 = vmatmul.mubr.f32.gmra.mxu0 %v421
        %v573 = vpop.f32.mrf.mxu0
        %v574 = vadd.f32 %v373, %v573
        %v575 = vpop.f32.mrf.mxu0
        %v576 = vadd.f32 %v377, %v575
        %577 = vmatprep.mubr.f32.mxu0 0.0
        %578 = vmatmul.mubr.f32.gmra.mxu0 %v424
        %v579 = vpop.f32.mrf.mxu0
        %v580 = vadd.f32 %v373, %v579
        %v581 = vpop.f32.mrf.mxu0
        %v582 = vadd.f32 %v377, %v581
        %583 = vmatprep.mubr.f32.mxu0 0.0
        %584 = vmatmul.mubr.f32.gmra.mxu0 %v427
        %v585 = vpop.f32.mrf.mxu0
        %v586 = vadd.f32 %v373, %v585
        %v587 = vpop.f32.mrf.mxu0
        %v588 = vadd.f32 %v377, %v587
        %589 = vdwg.mxu0
        %v590 = vld [vmem:[%s3] sm:$0xff]
        %v591 = vld [vmem:[%s3 + $0x8] sm:$0xff]
        %v592 = vld [vmem:[%s3 + $0x10] sm:$0xff]
        %v593 = vld [vmem:[%s3 + $0x18] sm:$0xff]
        %v594 = vld [vmem:[%s3 + $0x20] sm:$0xff]
        %v595 = vld [vmem:[%s3 + $0x28] sm:$0xff]
        %v596 = vld [vmem:[%s3 + $0x30] sm:$0xff]
        %v597 = vld [vmem:[%s3 + $0x38] sm:$0xff]
        %v598 = vld [vmem:[%s3 + $0x40] sm:$0xff]
        %v599 = vld [vmem:[%s3 + $0x48] sm:$0xff]
        %v600 = vld [vmem:[%s3 + $0x50] sm:$0xff]
        %v601 = vld [vmem:[%s3 + $0x58] sm:$0xff]
        %v602 = vld [vmem:[%s3 + $0x60] sm:$0xff]
        %v603 = vld [vmem:[%s3 + $0x68] sm:$0xff]
        %v604 = vld [vmem:[%s3 + $0x70] sm:$0xff]
        %v605 = vld [vmem:[%s3 + $0x78] sm:$0xff]
        %v606 = vld [vmem:[%s3 + $0x80] sm:$0xff]
        %v607 = vld [vmem:[%s3 + $0x88] sm:$0xff]
        %v608 = vld [vmem:[%s3 + $0x90] sm:$0xff]
        %v609 = vld [vmem:[%s3 + $0x98] sm:$0xff]
        %v610 = vld [vmem:[%s3 + $0xa0] sm:$0xff]
        %v611 = vld [vmem:[%s3 + $0xa8] sm:$0xff]
        %v612 = vld [vmem:[%s3 + $0xb0] sm:$0xff]
        %v613 = vld [vmem:[%s3 + $0xb8] sm:$0xff]
        %v614 = vld [vmem:[%s3 + $0xc0] sm:$0xff]
        %v615 = vld [vmem:[%s3 + $0xc8] sm:$0xff]
        %v616 = vld [vmem:[%s3 + $0xd0] sm:$0xff]
        %v617 = vld [vmem:[%s3 + $0xd8] sm:$0xff]
        %v618 = vld [vmem:[%s3 + $0xe0] sm:$0xff]
        %v619 = vld [vmem:[%s3 + $0xe8] sm:$0xff]
        %v620 = vld [vmem:[%s3 + $0xf0] sm:$0xff]
        %v621 = vld [vmem:[%s3 + $0xf8] sm:$0xff]
        %v622 = vld [vmem:[%s4] sm:$0x3]
        %v624 = vlaneseq
        %v625 = vshrl.u32 %v624, 7
        %v626 = vsub.s32 0, %v625
        %v627 = vrot.slane %v622, %v626
        %v628 = vlaneseq
        %v629 = vshrl.u32 %v628, 7
        %v630 = vsub.s32 1, %v629
        %v631 = vrot.slane %v622, %v630
        %634 = vmatprep.subr.mxu0 %v621
        %635 = vmatpush1.msra.mxu0 %v620
        %636 = vmatprep.subr.mxu0 %v619
        %637 = vmatpush1.msra.mxu0 %v618
        %638 = vmatprep.subr.mxu0 %v617
        %639 = vmatpush1.msra.mxu0 %v616
        %640 = vmatprep.subr.mxu0 %v615
        %641 = vmatpush1.msra.mxu0 %v614
        %642 = vmatprep.subr.mxu0 %v613
        %643 = vmatpush1.msra.mxu0 %v612
        %644 = vmatprep.subr.mxu0 %v611
        %645 = vmatpush1.msra.mxu0 %v610
        %646 = vmatprep.subr.mxu0 %v609
        %647 = vmatpush1.msra.mxu0 %v608
        %648 = vmatprep.subr.mxu0 %v607
        %649 = vmatpush1.msra.mxu0 %v606
        %650 = vmatprep.subr.mxu0 %v605
        %651 = vmatpush1.msra.mxu0 %v604
        %652 = vmatprep.subr.mxu0 %v603
        %653 = vmatpush1.msra.mxu0 %v602
        %654 = vmatprep.subr.mxu0 %v601
        %655 = vmatpush1.msra.mxu0 %v600
        %656 = vmatprep.subr.mxu0 %v599
        %657 = vmatpush1.msra.mxu0 %v598
        %658 = vmatprep.subr.mxu0 %v597
        %659 = vmatpush1.msra.mxu0 %v596
        %660 = vmatprep.subr.mxu0 %v595
        %661 = vmatpush1.msra.mxu0 %v594
        %662 = vmatprep.subr.mxu0 %v593
        %663 = vmatpush1.msra.mxu0 %v592
        %664 = vmatprep.subr.mxu0 %v591
        %665 = vmatpush1.msra.mxu0 %v590
        %666 = vmatprep.subr.mxu0 0.0
        %667 = vmatpush2.msra.mxu0 0.0
        %668 = vmatprep.subr.mxu0 0.0
        %669 = vmatpush2.msra.mxu0 0.0
        %670 = vmatprep.subr.mxu0 0.0
        %671 = vmatpush2.msra.mxu0 0.0
        %672 = vmatprep.subr.mxu0 0.0
        %673 = vmatpush2.msra.mxu0 0.0
        %674 = vmatprep.subr.mxu0 0.0
        %675 = vmatpush2.msra.mxu0 0.0
        %676 = vmatprep.subr.mxu0 0.0
        %677 = vmatpush2.msra.mxu0 0.0
        %678 = vmatprep.subr.mxu0 0.0
        %679 = vmatpush2.msra.mxu0 0.0
        %680 = vmatprep.subr.mxu0 0.0
        %681 = vmatpush2.msra.mxu0 0.0
        %682 = vmatprep.subr.mxu0 0.0
        %683 = vmatpush2.msra.mxu0 0.0
        %684 = vmatprep.subr.mxu0 0.0
        %685 = vmatpush2.msra.mxu0 0.0
        %686 = vmatprep.subr.mxu0 0.0
        %687 = vmatpush2.msra.mxu0 0.0
        %688 = vmatprep.subr.mxu0 0.0
        %689 = vmatpush2.msra.mxu0 0.0
        %690 = vmatprep.subr.mxu0 0.0
        %691 = vmatpush2.msra.mxu0 0.0
        %692 = vmatprep.subr.mxu0 0.0
        %693 = vmatpush2.msra.mxu0 0.0
        %694 = vmatprep.subr.mxu0 0.0
        %695 = vmatpush2.msra.mxu0 0.0
        %696 = vmatprep.subr.mxu0 0.0
        %697 = vmatpush2.msra.mxu0 0.0
        %698 = vmatprep.mubr.f32.mxu0 0.0
        %699 = vmatmul.mubr.f32.gmra.mxu0 %v496
        %v700 = vpop.f32.mrf.mxu0
        %v701 = vadd.f32 %v627, %v700
        %v702 = vpop.f32.mrf.mxu0
        %v703 = vadd.f32 %v631, %v702
        %704 = vmatprep.mubr.f32.mxu0 0.0
        %705 = vmatmul.mubr.f32.gmra.mxu0 %v502
        %v706 = vpop.f32.mrf.mxu0
        %v707 = vadd.f32 %v627, %v706
        %v708 = vpop.f32.mrf.mxu0
        %v709 = vadd.f32 %v631, %v708
        %710 = vmatprep.mubr.f32.mxu0 0.0
        %711 = vmatmul.mubr.f32.gmra.mxu0 %v508
        %v712 = vpop.f32.mrf.mxu0
        %v713 = vadd.f32 %v627, %v712
        %v714 = vpop.f32.mrf.mxu0
        %v715 = vadd.f32 %v631, %v714
        %716 = vmatprep.mubr.f32.mxu0 0.0
        %717 = vmatmul.mubr.f32.gmra.mxu0 %v514
        %v718 = vpop.f32.mrf.mxu0
        %v719 = vadd.f32 %v627, %v718
        %v720 = vpop.f32.mrf.mxu0
        %v721 = vadd.f32 %v631, %v720
        %722 = vmatprep.mubr.f32.mxu0 0.0
        %723 = vmatmul.mubr.f32.gmra.mxu0 %v520
        %v724 = vpop.f32.mrf.mxu0
        %v725 = vadd.f32 %v627, %v724
        %v726 = vpop.f32.mrf.mxu0
        %v727 = vadd.f32 %v631, %v726
        %728 = vmatprep.mubr.f32.mxu0 0.0
        %729 = vmatmul.mubr.f32.gmra.mxu0 %v526
        %v730 = vpop.f32.mrf.mxu0
        %v731 = vadd.f32 %v627, %v730
        %v732 = vpop.f32.mrf.mxu0
        %v733 = vadd.f32 %v631, %v732
        %734 = vmatprep.mubr.f32.mxu0 0.0
        %735 = vmatmul.mubr.f32.gmra.mxu0 %v532
        %v736 = vpop.f32.mrf.mxu0
        %v737 = vadd.f32 %v627, %v736
        %v738 = vpop.f32.mrf.mxu0
        %v739 = vadd.f32 %v631, %v738
        %740 = vmatprep.mubr.f32.mxu0 0.0
        %741 = vmatmul.mubr.f32.gmra.mxu0 %v538
        %v742 = vpop.f32.mrf.mxu0
        %v743 = vadd.f32 %v627, %v742
        %v744 = vpop.f32.mrf.mxu0
        %v745 = vadd.f32 %v631, %v744
        %746 = vmatprep.mubr.f32.mxu0 0.0
        %747 = vmatmul.mubr.f32.gmra.mxu0 %v544
        %v748 = vpop.f32.mrf.mxu0
        %v749 = vadd.f32 %v627, %v748
        %v750 = vpop.f32.mrf.mxu0
        %v751 = vadd.f32 %v631, %v750
        %752 = vmatprep.mubr.f32.mxu0 0.0
        %753 = vmatmul.mubr.f32.gmra.mxu0 %v550
        %v754 = vpop.f32.mrf.mxu0
        %v755 = vadd.f32 %v627, %v754
        %v756 = vpop.f32.mrf.mxu0
        %v757 = vadd.f32 %v631, %v756
        %758 = vmatprep.mubr.f32.mxu0 0.0
        %759 = vmatmul.mubr.f32.gmra.mxu0 %v556
        %v760 = vpop.f32.mrf.mxu0
        %v761 = vadd.f32 %v627, %v760
        %v762 = vpop.f32.mrf.mxu0
        %v763 = vadd.f32 %v631, %v762
        %764 = vmatprep.mubr.f32.mxu0 0.0
        %765 = vmatmul.mubr.f32.gmra.mxu0 %v562
        %v766 = vpop.f32.mrf.mxu0
        %v767 = vadd.f32 %v627, %v766
        %v768 = vpop.f32.mrf.mxu0
        %v769 = vadd.f32 %v631, %v768
        %770 = vmatprep.mubr.f32.mxu0 0.0
        %771 = vmatmul.mubr.f32.gmra.mxu0 %v568
        %v772 = vpop.f32.mrf.mxu0
        %v773 = vadd.f32 %v627, %v772
        %v774 = vpop.f32.mrf.mxu0
        %v775 = vadd.f32 %v631, %v774
        %776 = vmatprep.mubr.f32.mxu0 0.0
        %777 = vmatmul.mubr.f32.gmra.mxu0 %v574
        %v778 = vpop.f32.mrf.mxu0
        %v779 = vadd.f32 %v627, %v778
        %v780 = vpop.f32.mrf.mxu0
        %v781 = vadd.f32 %v631, %v780
        %782 = vmatprep.mubr.f32.mxu0 0.0
        %783 = vmatmul.mubr.f32.gmra.mxu0 %v580
        %v784 = vpop.f32.mrf.mxu0
        %v785 = vadd.f32 %v627, %v784
        %v786 = vpop.f32.mrf.mxu0
        %v787 = vadd.f32 %v631, %v786
        %788 = vmatprep.mubr.f32.mxu0 0.0
        %789 = vmatmul.mubr.f32.gmra.mxu0 %v586
        %v790 = vpop.f32.mrf.mxu0
        %v791 = vadd.f32 %v627, %v790
        %v792 = vpop.f32.mrf.mxu0
        %v793 = vadd.f32 %v631, %v792
        %794 = vdwg.mxu0
        %795 = vst [vmem:[%s304] sm:$0xff] %v701
        %796 = vst [vmem:[%s304 + $0x8] sm:$0xff] %v707
        %797 = vst [vmem:[%s304 + $0x10] sm:$0xff] %v713
        %798 = vst [vmem:[%s304 + $0x18] sm:$0xff] %v719
        %799 = vst [vmem:[%s304 + $0x20] sm:$0xff] %v725
        %800 = vst [vmem:[%s304 + $0x28] sm:$0xff] %v731
        %801 = vst [vmem:[%s304 + $0x30] sm:$0xff] %v737
        %802 = vst [vmem:[%s304 + $0x38] sm:$0xff] %v743
        %803 = vst [vmem:[%s304 + $0x40] sm:$0xff] %v749
        %804 = vst [vmem:[%s304 + $0x48] sm:$0xff] %v755
        %805 = vst [vmem:[%s304 + $0x50] sm:$0xff] %v761
        %806 = vst [vmem:[%s304 + $0x58] sm:$0xff] %v767
        %807 = vst [vmem:[%s304 + $0x60] sm:$0xff] %v773
        %808 = vst [vmem:[%s304 + $0x68] sm:$0xff] %v779
        %809 = vst [vmem:[%s304 + $0x70] sm:$0xff] %v785
        %810 = vst [vmem:[%s304 + $0x78] sm:$0xff] %v791
        %vm811 = vcmask 7168
        %812 = vst.msk [vmem:[%s342] sm:$0xff] %vm811, %v703
        %813 = vst.msk [vmem:[%s342 + $0x8] sm:$0xff] %vm811, %v709
        %814 = vst.msk [vmem:[%s342 + $0x10] sm:$0xff] %vm811, %v715
        %815 = vst.msk [vmem:[%s342 + $0x18] sm:$0xff] %vm811, %v721
        %816 = vst.msk [vmem:[%s342 + $0x20] sm:$0xff] %vm811, %v727
        %817 = vst.msk [vmem:[%s342 + $0x28] sm:$0xff] %vm811, %v733
        %818 = vst.msk [vmem:[%s342 + $0x30] sm:$0xff] %vm811, %v739
        %819 = vst.msk [vmem:[%s342 + $0x38] sm:$0xff] %vm811, %v745
        %820 = vst.msk [vmem:[%s342 + $0x40] sm:$0xff] %vm811, %v751
        %821 = vst.msk [vmem:[%s342 + $0x48] sm:$0xff] %vm811, %v757
        %822 = vst.msk [vmem:[%s342 + $0x50] sm:$0xff] %vm811, %v763
        %823 = vst.msk [vmem:[%s342 + $0x58] sm:$0xff] %vm811, %v769
        %824 = vst.msk [vmem:[%s342 + $0x60] sm:$0xff] %vm811, %v775
        %825 = vst.msk [vmem:[%s342 + $0x68] sm:$0xff] %vm811, %v781
        %826 = vst.msk [vmem:[%s342 + $0x70] sm:$0xff] %vm811, %v787
        %827 = vst.msk [vmem:[%s342 + $0x78] sm:$0xff] %vm811, %v793
        %828 = vxpose.xlu0.b32.start [1/16] %v498, 128
        %829 = vxpose.xlu0.b32.cont [2/16] %v504, 128
        %830 = vxpose.xlu0.b32.cont [3/16] %v510, 128
        %831 = vxpose.xlu0.b32.cont [4/16] %v516, 128
        %832 = vxpose.xlu0.b32.cont [5/16] %v522, 128
        %833 = vxpose.xlu0.b32.cont [6/16] %v528, 128
        %834 = vxpose.xlu0.b32.cont [7/16] %v534, 128
        %835 = vxpose.xlu0.b32.cont [8/16] %v540, 128
        %836 = vxpose.xlu0.b32.cont [9/16] %v546, 128
        %837 = vxpose.xlu0.b32.cont [10/16] %v552, 128
        %838 = vxpose.xlu0.b32.cont [11/16] %v558, 128
        %839 = vxpose.xlu0.b32.cont [12/16] %v564, 128
        %840 = vxpose.xlu0.b32.cont [13/16] %v570, 128
        %841 = vxpose.xlu0.b32.cont [14/16] %v576, 128
        %842 = vxpose.xlu0.b32.cont [15/16] %v582, 128
        %843 = vxpose.xlu0.b32.end [16/16] %v588, 128
        %v844 = vpop.trf.xlu0
        %v845 = vpop.trf.xlu0
        %v846 = vpop.trf.xlu0
        %v847 = vpop.trf.xlu0
        %v848 = vpop.trf.xlu0
        %v849 = vpop.trf.xlu0
        %v850 = vpop.trf.xlu0
        %v851 = vpop.trf.xlu0
        %v852 = vpop.trf.xlu0
        %v853 = vpop.trf.xlu0
        %v854 = vpop.trf.xlu0
        %v855 = vpop.trf.xlu0
        %v856 = vpop.trf.xlu0
        %v857 = vpop.trf.xlu0
        %v858 = vpop.trf.xlu0
        %v859 = vpop.trf.xlu0
        %860 = vst [vmem:[%s311] sm:$0xff] %v844
        %861 = vst [vmem:[%s311 + $0x8] sm:$0xff] %v845
        %862 = vst [vmem:[%s311 + $0x10] sm:$0xff] %v846
        %863 = vst [vmem:[%s311 + $0x18] sm:$0xff] %v847
        %864 = vst [vmem:[%s311 + $0x20] sm:$0xff] %v848
        %865 = vst [vmem:[%s311 + $0x28] sm:$0xff] %v849
        %866 = vst [vmem:[%s311 + $0x30] sm:$0xff] %v850
        %867 = vst [vmem:[%s311 + $0x38] sm:$0xff] %v851
        %868 = vst [vmem:[%s311 + $0x40] sm:$0xff] %v852
        %869 = vst [vmem:[%s311 + $0x48] sm:$0xff] %v853
        %870 = vst [vmem:[%s311 + $0x50] sm:$0xff] %v854
        %871 = vst [vmem:[%s311 + $0x58] sm:$0xff] %v855
        %872 = vst [vmem:[%s311 + $0x60] sm:$0xff] %v856
        %873 = vst [vmem:[%s311 + $0x68] sm:$0xff] %v857
        %874 = vst [vmem:[%s311 + $0x70] sm:$0xff] %v858
        %875 = vst [vmem:[%s311 + $0x78] sm:$0xff] %v859
        %s876 = sand.u32 %s159, 1
        %s877 = scalar_lea.sflag [#allocation3], %s876
        %s878 = sand.u32 %s159, 1
        %s879 = smul.addr %s878, 128
        %s880 = scalar_lea.vmem [#allocation2], %s879
        %s881 = sand.u32 %s187, 1
        %s882 = scalar_lea.sflag [#allocation5], %s881
        %s883 = sand.u32 %s187, 1
        %s884 = smul.addr %s883, 128
        %s885 = scalar_lea.vmem [#allocation4], %s884
        %s886 = smul.u32 16, %s30
        %p887 = scmp.lt.s32.totalorder %s29, 1
        %s888 = scalar_select %p887, %s29, 1
        %p889 = scmp.lt.s32.totalorder %s886, 15
        %s890 = scalar_select %p889, %s886, 15
        %s891 = smul.addr %s888, 16
        %s892 = sadd.s32 %s890, %s891
        %s893 = smul.addr %s892, 8
        %s894 = scalar_lea.vmem %s7, %s893
        // Predicated region
        $region41: #{tpu_custom_call.1} parent=39 // pred_check
          %p895 = pneg %p169
        $region42: #{tpu_custom_call.1} parent=39 // pred_check_branch
          %897 = sbr.rel (%p895) target = $region44
        $region43: #{tpu_custom_call.1} parent=39 // pred_region
          %s898 = smul.u32 16, %s30
          %s900 = ssub.s32 2048, 2048
          %901 = vsyncadd %s877, %s900
          %s902 = smul.addr %s29, 16
          %s903 = sadd.s32 %s898, %s902
          %s904 = smul.addr %s903, 128
          %s905 = scalar_lea.hbm %s5, %s904
          %s906 = sshll.u32 %s880, 4
          %s907 = int_to_ptr.vmem [resolvable:$true] %s906
          %912 = dma.vmem_to_hbm [thread:$0]  %s907, 2048, %s905, %s877, 128, 128, 8
        $region44: #{tpu_custom_call.1} parent=39 // pred_fallthru
          _
        // Predicated region
        $region45: #{tpu_custom_call.1} parent=39 // pred_check
          %p913 = pneg %p197
        $region46: #{tpu_custom_call.1} parent=39 // pred_check_branch
          %915 = sbr.rel (%p913) target = $region48
        $region47: #{tpu_custom_call.1} parent=39 // pred_region
          %s917 = ssub.s32 2048, 2048
          %918 = vsyncadd %s882, %s917
          %s919 = smul.addr %s29, 16
          %s920 = sadd.s32 %s30, %s919
          %s921 = smul.addr %s920, 128
          %s922 = scalar_lea.hbm %s6, %s921
          %s923 = sshll.u32 %s885, 4
          %s924 = int_to_ptr.vmem [resolvable:$true] %s923
          %929 = dma.vmem_to_hbm [thread:$0]  %s924, 2048, %s922, %s882, 128, 128, 8
        $region48: #{tpu_custom_call.1} parent=39 // pred_fallthru
          _
        // Predicated region
        $region49: #{tpu_custom_call.1} parent=39 // pred_check
          %p930 = pneg %p225
        $region50: #{tpu_custom_call.1} parent=39 // pred_check_branch
          %932 = sbr.rel (%p930) target = $region52
        $region51: #{tpu_custom_call.1} parent=39 // pred_region
          %s933 = smul.u32 16, %s30
        $region52: #{tpu_custom_call.1} parent=39 // pred_fallthru
          _
      $region40: #{tpu_custom_call.1} parent=5 // pred_fallthru
        _
      %p934 = scmp.le.s32.totalorder 2, %s20
      // Predicated region
      $region53: #{tpu_custom_call.1} parent=5 // pred_check
        %p935 = pneg %p934
      $region54: #{tpu_custom_call.1} parent=5 // pred_check_branch
        %937 = sbr.rel (%p935) target = $region56
      $region55: #{tpu_custom_call.1} parent=5 // pred_region
        %s938 = ssub.s32 %s20, 2
        // Predicated region
        $region57: #{tpu_custom_call.1} parent=55 // pred_check
          %p939 = pneg %p175
        $region58: #{tpu_custom_call.1} parent=55 // pred_check_branch
          %941 = sbr.rel (%p939) target = $region60
        $region59: #{tpu_custom_call.1} parent=55 // pred_region
          %s942 = sand.u32 %s160, 1
          %s943 = scalar_lea.sflag [#allocation3], %s942
          %s944 = sand.u32 %s160, 1
          %s945 = smul.addr %s944, 128
          %s946 = scalar_lea.vmem [#allocation2], %s945
          %947 = dma.done %s943, 2048
        $region60: #{tpu_custom_call.1} parent=55 // pred_fallthru
          _
        // Predicated region
        $region61: #{tpu_custom_call.1} parent=55 // pred_check
          %p948 = pneg %p203
        $region62: #{tpu_custom_call.1} parent=55 // pred_check_branch
          %950 = sbr.rel (%p948) target = $region64
        $region63: #{tpu_custom_call.1} parent=55 // pred_region
          %s951 = sand.u32 %s188, 1
          %s952 = scalar_lea.sflag [#allocation5], %s951
          %s953 = sand.u32 %s188, 1
          %s954 = smul.addr %s953, 128
          %s955 = scalar_lea.vmem [#allocation4], %s954
          %956 = dma.done %s952, 2048
        $region64: #{tpu_custom_call.1} parent=55 // pred_fallthru
          _
        // Predicated region
        $region65: #{tpu_custom_call.1} parent=55 // pred_check
          %p957 = pneg %p231
        $region66: #{tpu_custom_call.1} parent=55 // pred_check_branch
          %959 = sbr.rel (%p957) target = $region68
        $region67: #{tpu_custom_call.1} parent=55 // pred_region
          %s960 = smul.u32 16, %s32
          %p961 = scmp.lt.s32.totalorder %s31, 1
          %s962 = scalar_select %p961, %s31, 1
          %p963 = scmp.lt.s32.totalorder %s960, 15
          %s964 = scalar_select %p963, %s960, 15
          %s965 = smul.addr %s962, 16
          %s966 = sadd.s32 %s964, %s965
          %s967 = smul.addr %s966, 8
          %s968 = scalar_lea.vmem %s7, %s967
        $region68: #{tpu_custom_call.1} parent=55 // pred_fallthru
          _
      $region56: #{tpu_custom_call.1} parent=5 // pred_fallthru
        _
    $region6: #{tpu_custom_call.1} parent=1 // loop_footer
      %s24 = sadd.s32 1, %s20
    $region7: #{tpu_custom_call.1} parent=1 // loop_footer_branch
      %19 = sbr.rel target = $region3
    $region8: #{tpu_custom_call.1} parent=1 // loop_exit
      _
    %969 = vsyncpa [#allocation3], 1
    %s970 = scalar_lea.sflag [#allocation3], 1
    %971 = vsyncpa %s970, 1
    %972 = vsyncpa [#allocation5], 1
    %s973 = scalar_lea.sflag [#allocation5], 1
    %974 = vsyncpa %s973, 1

</llo_original>
